<compile_context>
chip_gen: v7x
topology: tpu7x:2x2x1
jax: 0.10.0
libtpu: 0.0.40
codegen_flags: <defaults>
</compile_context>

<pallas_src>
from functools import partial

import jax
import jax.numpy as jnp
from jax.experimental import pallas as pl
from jax.experimental.pallas import tpu as pltpu

LANE = 128            # vreg lane width (last dim)
SUBLANE = 8           # vreg sublane width (second-to-last dim)
MAX_TILE_ROWS = 1024  # batch tile; 1024x128 f32 = 512 KiB -> trivially fits VMEM


def _round_up(n, m):
    return ((n + m - 1) // m) * m


def latent_block_kernel(x_ref, w1_ref, b1_ref, w2_ref, b2_ref, o_ref):
    # Hot path: two MXU matmuls (f32 accumulation) + tanh (EUP), all in VMEM.
    x = x_ref[...]
    h = jnp.dot(x, w1_ref[...], preferred_element_type=jnp.float32) + b1_ref[...]
    h = jnp.tanh(h)
    y = jnp.dot(h, w2_ref[...], preferred_element_type=jnp.float32) + b2_ref[...]
    o_ref[...] = y.astype(o_ref.dtype)


@jax.jit
def latent_block(x, w1, b1, w2, b2):
    """x: (B, input_dim); w1: (input_dim, nhidden); b1: (1, nhidden);
    w2: (nhidden, nhidden); b2: (1, nhidden)  ->  (B, nhidden)"""
    B, in_dim = x.shape
    nhidden = w2.shape[1]
    dtype = x.dtype

    # ---- lane-dense padding (feature dims -> multiples of 128) -------------
    Kp = _round_up(in_dim, LANE)     # padded contraction dim
    Np = _round_up(nhidden, LANE)    # padded hidden/output dim

    # ---- batch tiling -------------------------------------------------------
    tile_rows = MAX_TILE_ROWS if B >= MAX_TILE_ROWS else _round_up(B, SUBLANE)
    Bp = _round_up(B, tile_rows)

    # Zero padding keeps the math exact: padded x columns are zero, padded W
    # rows/cols and bias entries are zero, and padded rows/cols are sliced off.
    xp = jnp.pad(x, ((0, Bp - B), (0, Kp - in_dim)))
    w1p = jnp.pad(w1, ((0, Kp - in_dim), (0, Np - nhidden)))
    b1p = jnp.pad(b1, ((0, 0), (0, Np - nhidden)))
    w2p = jnp.pad(w2, ((0, Np - nhidden), (0, Np - nhidden)))
    b2p = jnp.pad(b2, ((0, 0), (0, Np - nhidden)))

    grid = (Bp // tile_rows,)

    out_p = pl.pallas_call(
        latent_block_kernel,
        out_shape=jax.ShapeDtypeStruct((Bp, Np), dtype),
        grid=grid,
        in_specs=[
            # x: tiled over the batch grid axis.
            pl.BlockSpec((tile_rows, Kp), lambda i: (i, 0)),
            # Weights/biases: constant index_map -> grid-invariant, stay
            # VMEM-resident, DMA'd exactly once (never re-fetched per tile).
            pl.BlockSpec((Kp, Np), lambda i: (0, 0)),
            pl.BlockSpec((1, Np), lambda i: (0, 0)),
            pl.BlockSpec((Np, Np), lambda i: (0, 0)),
            pl.BlockSpec((1, Np), lambda i: (0, 0)),
        ],
        # Lane-dense output (last dim = multiple of 128) -> unmasked vst.
        out_specs=pl.BlockSpec((tile_rows, Np), lambda i: (i, 0)),
        compiler_params=pltpu.CompilerParams(
            # Batch axis is embarrassingly parallel -> shard across the two
            # TensorCores on v7x (harmless on single-TC v5e/v6e).
            dimension_semantics=("parallel",),
            # Explicit budget; tiles are tiny, well under v7x's 32 MiB scoped
            # default, but keep it pinned so pipelining depth never shrinks.
            vmem_limit_bytes=32 * 1024 * 1024,
        ),
    )(xp, w1p, b1p, w2p, b2p)

    # Slice away batch + feature padding (fused into the jitted program).
    return out_p[:B, :nhidden]


if __name__ == "__main__":
    input_dim = 4
    nhidden = 20
    batch = 8

    key = jax.random.PRNGKey(0)
    kx, k1, k2, k3, k4 = jax.random.split(key, 5)

    # Deterministic parameter init (PyTorch Linear-style uniform bounds).
    bound1 = 1.0 / jnp.sqrt(input_dim)
    bound2 = 1.0 / jnp.sqrt(nhidden)
    w1 = jax.random.uniform(k1, (input_dim, nhidden), jnp.float32, -bound1, bound1)
    b1 = jax.random.uniform(k2, (1, nhidden), jnp.float32, -bound1, bound1)
    w2 = jax.random.uniform(k3, (nhidden, nhidden), jnp.float32, -bound2, bound2)
    b2 = jax.random.uniform(k4, (1, nhidden), jnp.float32, -bound2, bound2)

    x = jax.random.normal(kx, (batch, input_dim), jnp.float32)

    out = latent_block(x, w1, b1, w2, b2)
    out = jax.block_until_ready(out)

    # Pure-JAX reference check (same semantics as the PyTorch forward).
    ref = jnp.tanh(x @ w1 + b1) @ w2 + b2
    assert out.shape == (batch, nhidden)
    assert jnp.allclose(out, ref, atol=1e-5, rtol=1e-5)

    # Also exercise the gridded path with a batch large enough to tile
    # (non-multiple of the tile to exercise batch padding too).
    big_b = 2000
    xb = jax.random.normal(kx, (big_b, input_dim), jnp.float32)
    out_big = jax.block_until_ready(latent_block(xb, w1, b1, w2, b2))
    ref_big = jnp.tanh(xb @ w1 + b1) @ w2 + b2
    assert out_big.shape == (big_b, nhidden)
    assert jnp.allclose(out_big, ref_big, atol=1e-5, rtol=1e-5)

    print("KERNEL_OK")
</pallas_src>

<mosaic_0001>
module attributes {stable_mosaic.version = 11 : i64} {
  func.func @latent_block_kernel(%arg0: i32, %arg1: memref<8x128xf32, #tpu.memory_space<vmem>>, %arg2: memref<128x128xf32, #tpu.memory_space<vmem>>, %arg3: memref<1x128xf32, #tpu.memory_space<vmem>>, %arg4: memref<128x128xf32, #tpu.memory_space<vmem>>, %arg5: memref<1x128xf32, #tpu.memory_space<vmem>>, %arg6: memref<8x128xf32, #tpu.memory_space<vmem>>) attributes {dimension_semantics = [#tpu.dimension_semantics<parallel>], iteration_bounds = array<i64: 1>, scalar_prefetch = 0 : i64, scratch_operands = 0 : i64, tpu.core_type = #tpu.core_type<tc>, window_params = [{transform_indices = @transform_0, window_bounds = array<i64: 8, 128>}, {pipeline_mode = #tpu.pipeline_mode<synchronous>, transform_indices = @transform_1, window_bounds = array<i64: 128, 128>}, {pipeline_mode = #tpu.pipeline_mode<synchronous>, transform_indices = @transform_2, window_bounds = array<i64: 1, 128>}, {pipeline_mode = #tpu.pipeline_mode<synchronous>, transform_indices = @transform_3, window_bounds = array<i64: 128, 128>}, {pipeline_mode = #tpu.pipeline_mode<synchronous>, transform_indices = @transform_4, window_bounds = array<i64: 1, 128>}, {transform_indices = @transform_5, window_bounds = array<i64: 8, 128>}]} {
    %c0 = arith.constant 0 : index
    %c0_0 = arith.constant 0 : index
    %0 = vector.load %arg1[%c0, %c0_0] : memref<8x128xf32, #tpu.memory_space<vmem>>, vector<8x128xf32>
    %c0_1 = arith.constant 0 : index
    %c0_2 = arith.constant 0 : index
    %1 = vector.load %arg2[%c0_1, %c0_2] : memref<128x128xf32, #tpu.memory_space<vmem>>, vector<128x128xf32>
    %cst = arith.constant dense<0.000000e+00> : vector<8x128xf32>
    %2 = tpu.matmul %0, %1, %cst {dimension_numbers = #tpu.dot_dimension_numbers<[1], [0], [0], [1], [0, 0, 1, 1], [], []>} : vector<8x128xf32>, vector<128x128xf32>, vector<8x128xf32> -> vector<8x128xf32>
    %c0_3 = arith.constant 0 : index
    %c0_4 = arith.constant 0 : index
    %3 = vector.load %arg3[%c0_3, %c0_4] : memref<1x128xf32, #tpu.memory_space<vmem>>, vector<1x128xf32>
    %4 = vector.broadcast %3 : vector<1x128xf32> to vector<8x128xf32>
    %5 = arith.addf %2, %4 : vector<8x128xf32>
    %6 = math.tanh %5 : vector<8x128xf32>
    %c0_5 = arith.constant 0 : index
    %c0_6 = arith.constant 0 : index
    %7 = vector.load %arg4[%c0_5, %c0_6] : memref<128x128xf32, #tpu.memory_space<vmem>>, vector<128x128xf32>
    %cst_7 = arith.constant dense<0.000000e+00> : vector<8x128xf32>
    %8 = tpu.matmul %6, %7, %cst_7 {dimension_numbers = #tpu.dot_dimension_numbers<[1], [0], [0], [1], [0, 0, 1, 1], [], []>} : vector<8x128xf32>, vector<128x128xf32>, vector<8x128xf32> -> vector<8x128xf32>
    %c0_8 = arith.constant 0 : index
    %c0_9 = arith.constant 0 : index
    %9 = vector.load %arg5[%c0_8, %c0_9] : memref<1x128xf32, #tpu.memory_space<vmem>>, vector<1x128xf32>
    %10 = vector.broadcast %9 : vector<1x128xf32> to vector<8x128xf32>
    %11 = arith.addf %8, %10 : vector<8x128xf32>
    %c0_10 = arith.constant 0 : index
    %c0_11 = arith.constant 0 : index
    %12 = vector.load %arg6[%c0_10, %c0_11] : memref<8x128xf32, #tpu.memory_space<vmem>>, vector<8x128xf32>
    tpu.vector_store %arg6[%c0_10, %c0_11], %11 {strides = array<i32>} : memref<8x128xf32, #tpu.memory_space<vmem>>, vector<8x128xf32>,
    return
  }
  func.func @transform_0(%arg0: i32) -> (i32, i32) {
    %c0_i32 = arith.constant 0 : i32
    %c0_i32_0 = arith.constant 0 : i32
    return %arg0, %c0_i32 : i32, i32
  }
  func.func @transform_1(%arg0: i32) -> (i32, i32) {
    %c0_i32 = arith.constant 0 : i32
    %c0_i32_0 = arith.constant 0 : i32
    %c0_i32_1 = arith.constant 0 : i32
    return %c0_i32, %c0_i32_0 : i32, i32
  }
  func.func @transform_2(%arg0: i32) -> (i32, i32) {
    %c0_i32 = arith.constant 0 : i32
    %c0_i32_0 = arith.constant 0 : i32
    %c0_i32_1 = arith.constant 0 : i32
    return %c0_i32, %c0_i32_0 : i32, i32
  }
  func.func @transform_3(%arg0: i32) -> (i32, i32) {
    %c0_i32 = arith.constant 0 : i32
    %c0_i32_0 = arith.constant 0 : i32
    %c0_i32_1 = arith.constant 0 : i32
    return %c0_i32, %c0_i32_0 : i32, i32
  }
  func.func @transform_4(%arg0: i32) -> (i32, i32) {
    %c0_i32 = arith.constant 0 : i32
    %c0_i32_0 = arith.constant 0 : i32
    %c0_i32_1 = arith.constant 0 : i32
    return %c0_i32, %c0_i32_0 : i32, i32
  }
  func.func @transform_5(%arg0: i32) -> (i32, i32) {
    %c0_i32 = arith.constant 0 : i32
    %c0_i32_0 = arith.constant 0 : i32
    return %arg0, %c0_i32 : i32, i32
  }
}

</mosaic_0001>

<llo_original>
// kernel: latent_block.1
$region0: #{latent_block.1}
  #allocation0 [shape = 'u32[]', space=smem, size = 0x4, offset = 0x4, fixed_abs, tag = 'smem constant byte address 0x4 - core index']
  #allocation1 [shape = 'u32[144,128]{1,0:T(1,128)}', space=vmem, size = 0x12000, scoped, tag = 'internal scratch']
  %s0 = inlined_call_operand.vmem [shape: f32[8,128], index: 0, kind: input, shape index: {}]
  %s1 = inlined_call_operand.vmem [shape: f32[128,128], index: 1, kind: input, shape index: {}]
  %s2 = inlined_call_operand.vmem [shape: f32[1,128], index: 2, kind: input, shape index: {}]
  %s3 = inlined_call_operand.vmem [shape: f32[128,128], index: 3, kind: input, shape index: {}]
  %s4 = inlined_call_operand.vmem [shape: f32[1,128], index: 4, kind: input, shape index: {}]
  %s5 = inlined_call_operand.hbm [shape: f32[8,128], index: 5, kind: output, shape index: {}]
  %s6 = sld [smem:[#allocation0]]
  $region30: #{latent_block.1} parent=0
    _
  %s8 = ssub.s32 1, %s6
  %s9 = scalar_select 0, %s8, %s6
  $region1: #{latent_block.1} parent=0
    #allocation2 [shape = 'u8[4096]{0}', space=vmem, size = 0x1000, scoped, tag = 'output window, operand 0, single buffered']
    #allocation3 [shape = 's32[1]{0}', space=sflag, size = 0x4, scoped, tag = 'scoped memory for latent_block.1']
    %10 = vsyncpa [#allocation3], 0
    // Predicated region
    $region2: #{latent_block.1} parent=1 // pred_check
      _
    $region3: #{latent_block.1} parent=1 // pred_check_branch
      %12 = sbr.rel (0) target = $region5
    $region4: #{latent_block.1} parent=1 // pred_region
      _
    $region5: #{latent_block.1} parent=1 // pred_fallthru
      _
    // Predicated region
    $region6: #{latent_block.1} parent=1 // pred_check
      _
    $region7: #{latent_block.1} parent=1 // pred_check_branch
      %14 = sbr.rel (0) target = $region9
    $region8: #{latent_block.1} parent=1 // pred_region
      _
    $region9: #{latent_block.1} parent=1 // pred_fallthru
      _
    // Predicated region
    $region10: #{latent_block.1} parent=1 // pred_check
      _
    $region11: #{latent_block.1} parent=1 // pred_check_branch
      %16 = sbr.rel (0) target = $region13
    $region12: #{latent_block.1} parent=1 // pred_region
      _
    $region13: #{latent_block.1} parent=1 // pred_fallthru
      _
    // Predicated region
    $region14: #{latent_block.1} parent=1 // pred_check
      _
    $region15: #{latent_block.1} parent=1 // pred_check_branch
      %18 = sbr.rel (0) target = $region17
    $region16: #{latent_block.1} parent=1 // pred_region
      _
    $region17: #{latent_block.1} parent=1 // pred_fallthru
      _
    // Predicated region
    $region18: #{latent_block.1} parent=1 // pred_check
      _
    $region19: #{latent_block.1} parent=1 // pred_check_branch
      %20 = sbr.rel (0) target = $region21
    $region20: #{latent_block.1} parent=1 // pred_region
      _
    $region21: #{latent_block.1} parent=1 // pred_fallthru
      _
    %v21 = vld [vmem:[%s0] sm:$0xff]
    %v22 = vld [vmem:[%s1] sm:$0xff]
    %v23 = vld [vmem:[%s1 + $0x8] sm:$0xff]
    %v24 = vld [vmem:[%s1 + $0x10] sm:$0xff]
    %v25 = vld [vmem:[%s1 + $0x18] sm:$0xff]
    %v26 = vld [vmem:[%s1 + $0x20] sm:$0xff]
    %v27 = vld [vmem:[%s1 + $0x28] sm:$0xff]
    %v28 = vld [vmem:[%s1 + $0x30] sm:$0xff]
    %v29 = vld [vmem:[%s1 + $0x38] sm:$0xff]
    %v30 = vld [vmem:[%s1 + $0x40] sm:$0xff]
    %v31 = vld [vmem:[%s1 + $0x48] sm:$0xff]
    %v32 = vld [vmem:[%s1 + $0x50] sm:$0xff]
    %v33 = vld [vmem:[%s1 + $0x58] sm:$0xff]
    %v34 = vld [vmem:[%s1 + $0x60] sm:$0xff]
    %v35 = vld [vmem:[%s1 + $0x68] sm:$0xff]
    %v36 = vld [vmem:[%s1 + $0x70] sm:$0xff]
    %v37 = vld [vmem:[%s1 + $0x78] sm:$0xff]
    %v38 = vld [vmem:[%s2] sm:$0x1]
    %v40 = vlaneseq
    %v41 = vshrl.u32 %v40, 7
    %v42 = vsub.s32 0, %v41
    %v43 = vrot.slane %v38, %v42
    %45 = vmatprep.subr.mxu0 0.0
    %46 = vmatpush1.msra.mxu0 %v22
    %47 = vmatprep.subr.mxu0 0.0
    %48 = vmatpush1.msra.mxu0 %v23
    %49 = vmatprep.subr.mxu0 0.0
    %50 = vmatpush1.msra.mxu0 %v24
    %51 = vmatprep.subr.mxu0 0.0
    %52 = vmatpush1.msra.mxu0 %v25
    %53 = vmatprep.subr.mxu0 0.0
    %54 = vmatpush1.msra.mxu0 %v26
    %55 = vmatprep.subr.mxu0 0.0
    %56 = vmatpush1.msra.mxu0 %v27
    %57 = vmatprep.subr.mxu0 0.0
    %58 = vmatpush1.msra.mxu0 %v28
    %59 = vmatprep.subr.mxu0 0.0
    %60 = vmatpush1.msra.mxu0 %v29
    %61 = vmatprep.subr.mxu0 0.0
    %62 = vmatpush1.msra.mxu0 %v30
    %63 = vmatprep.subr.mxu0 0.0
    %64 = vmatpush1.msra.mxu0 %v31
    %65 = vmatprep.subr.mxu0 0.0
    %66 = vmatpush1.msra.mxu0 %v32
    %67 = vmatprep.subr.mxu0 0.0
    %68 = vmatpush1.msra.mxu0 %v33
    %69 = vmatprep.subr.mxu0 0.0
    %70 = vmatpush1.msra.mxu0 %v34
    %71 = vmatprep.subr.mxu0 0.0
    %72 = vmatpush1.msra.mxu0 %v35
    %73 = vmatprep.subr.mxu0 0.0
    %74 = vmatpush1.msra.mxu0 %v36
    %75 = vmatprep.subr.mxu0 0.0
    %76 = vmatpush1.msra.mxu0 %v37
    %77 = vmatprep.subr.mxu0 0.0
    %78 = vmatpush1.msra.mxu0 0.0
    %79 = vmatprep.subr.mxu0 0.0
    %80 = vmatpush1.msra.mxu0 0.0
    %81 = vmatprep.subr.mxu0 0.0
    %82 = vmatpush1.msra.mxu0 0.0
    %83 = vmatprep.subr.mxu0 0.0
    %84 = vmatpush1.msra.mxu0 0.0
    %85 = vmatprep.subr.mxu0 0.0
    %86 = vmatpush1.msra.mxu0 0.0
    %87 = vmatprep.subr.mxu0 0.0
    %88 = vmatpush1.msra.mxu0 0.0
    %89 = vmatprep.subr.mxu0 0.0
    %90 = vmatpush1.msra.mxu0 0.0
    %91 = vmatprep.subr.mxu0 0.0
    %92 = vmatpush1.msra.mxu0 0.0
    %93 = vmatprep.subr.mxu0 0.0
    %94 = vmatpush1.msra.mxu0 0.0
    %95 = vmatprep.subr.mxu0 0.0
    %96 = vmatpush1.msra.mxu0 0.0
    %97 = vmatprep.subr.mxu0 0.0
    %98 = vmatpush1.msra.mxu0 0.0
    %99 = vmatprep.subr.mxu0 0.0
    %100 = vmatpush1.msra.mxu0 0.0
    %101 = vmatprep.subr.mxu0 0.0
    %102 = vmatpush1.msra.mxu0 0.0
    %103 = vmatprep.subr.mxu0 0.0
    %104 = vmatpush1.msra.mxu0 0.0
    %105 = vmatprep.subr.mxu0 0.0
    %106 = vmatpush1.msra.mxu0 0.0
    %107 = vmatprep.subr.mxu0 0.0
    %108 = vmatpush1.msra.mxu0 0.0
    %109 = vmatprep.mubr.f32.mxu0 0.0
    %110 = vmatmul.mubr.f32.gmra.mrb[0].mxu0 %v21
    %v111 = vpop.f32.mrb[0].mxu0
    %v112 = vadd.f32 %v43, %v111
    %v113 = vpop.f32.mrb[0].mxu0
    %114 = vdwg.mxu0
    %v115 = vtanh.pop %v112
    %v116 = vld [vmem:[%s3] sm:$0xff]
    %v117 = vld [vmem:[%s3 + $0x8] sm:$0xff]
    %v118 = vld [vmem:[%s3 + $0x10] sm:$0xff]
    %v119 = vld [vmem:[%s3 + $0x18] sm:$0xff]
    %v120 = vld [vmem:[%s3 + $0x20] sm:$0xff]
    %v121 = vld [vmem:[%s3 + $0x28] sm:$0xff]
    %v122 = vld [vmem:[%s3 + $0x30] sm:$0xff]
    %v123 = vld [vmem:[%s3 + $0x38] sm:$0xff]
    %v124 = vld [vmem:[%s3 + $0x40] sm:$0xff]
    %v125 = vld [vmem:[%s3 + $0x48] sm:$0xff]
    %v126 = vld [vmem:[%s3 + $0x50] sm:$0xff]
    %v127 = vld [vmem:[%s3 + $0x58] sm:$0xff]
    %v128 = vld [vmem:[%s3 + $0x60] sm:$0xff]
    %v129 = vld [vmem:[%s3 + $0x68] sm:$0xff]
    %v130 = vld [vmem:[%s3 + $0x70] sm:$0xff]
    %v131 = vld [vmem:[%s3 + $0x78] sm:$0xff]
    %v132 = vld [vmem:[%s4] sm:$0x1]
    %v134 = vlaneseq
    %v135 = vshrl.u32 %v134, 7
    %v136 = vsub.s32 0, %v135
    %v137 = vrot.slane %v132, %v136
    %139 = vmatprep.subr.mxu0 0.0
    %140 = vmatpush1.msra.mxu0 %v116
    %141 = vmatprep.subr.mxu0 0.0
    %142 = vmatpush1.msra.mxu0 %v117
    %143 = vmatprep.subr.mxu0 0.0
    %144 = vmatpush1.msra.mxu0 %v118
    %145 = vmatprep.subr.mxu0 0.0
    %146 = vmatpush1.msra.mxu0 %v119
    %147 = vmatprep.subr.mxu0 0.0
    %148 = vmatpush1.msra.mxu0 %v120
    %149 = vmatprep.subr.mxu0 0.0
    %150 = vmatpush1.msra.mxu0 %v121
    %151 = vmatprep.subr.mxu0 0.0
    %152 = vmatpush1.msra.mxu0 %v122
    %153 = vmatprep.subr.mxu0 0.0
    %154 = vmatpush1.msra.mxu0 %v123
    %155 = vmatprep.subr.mxu0 0.0
    %156 = vmatpush1.msra.mxu0 %v124
    %157 = vmatprep.subr.mxu0 0.0
    %158 = vmatpush1.msra.mxu0 %v125
    %159 = vmatprep.subr.mxu0 0.0
    %160 = vmatpush1.msra.mxu0 %v126
    %161 = vmatprep.subr.mxu0 0.0
    %162 = vmatpush1.msra.mxu0 %v127
    %163 = vmatprep.subr.mxu0 0.0
    %164 = vmatpush1.msra.mxu0 %v128
    %165 = vmatprep.subr.mxu0 0.0
    %166 = vmatpush1.msra.mxu0 %v129
    %167 = vmatprep.subr.mxu0 0.0
    %168 = vmatpush1.msra.mxu0 %v130
    %169 = vmatprep.subr.mxu0 0.0
    %170 = vmatpush1.msra.mxu0 %v131
    %171 = vmatprep.subr.mxu0 0.0
    %172 = vmatpush1.msra.mxu0 0.0
    %173 = vmatprep.subr.mxu0 0.0
    %174 = vmatpush1.msra.mxu0 0.0
    %175 = vmatprep.subr.mxu0 0.0
    %176 = vmatpush1.msra.mxu0 0.0
    %177 = vmatprep.subr.mxu0 0.0
    %178 = vmatpush1.msra.mxu0 0.0
    %179 = vmatprep.subr.mxu0 0.0
    %180 = vmatpush1.msra.mxu0 0.0
    %181 = vmatprep.subr.mxu0 0.0
    %182 = vmatpush1.msra.mxu0 0.0
    %183 = vmatprep.subr.mxu0 0.0
    %184 = vmatpush1.msra.mxu0 0.0
    %185 = vmatprep.subr.mxu0 0.0
    %186 = vmatpush1.msra.mxu0 0.0
    %187 = vmatprep.subr.mxu0 0.0
    %188 = vmatpush1.msra.mxu0 0.0
    %189 = vmatprep.subr.mxu0 0.0
    %190 = vmatpush1.msra.mxu0 0.0
    %191 = vmatprep.subr.mxu0 0.0
    %192 = vmatpush1.msra.mxu0 0.0
    %193 = vmatprep.subr.mxu0 0.0
    %194 = vmatpush1.msra.mxu0 0.0
    %195 = vmatprep.subr.mxu0 0.0
    %196 = vmatpush1.msra.mxu0 0.0
    %197 = vmatprep.subr.mxu0 0.0
    %198 = vmatpush1.msra.mxu0 0.0
    %199 = vmatprep.subr.mxu0 0.0
    %200 = vmatpush1.msra.mxu0 0.0
    %201 = vmatprep.subr.mxu0 0.0
    %202 = vmatpush1.msra.mxu0 0.0
    %203 = vmatprep.mubr.f32.mxu0 0.0
    %204 = vmatmul.mubr.f32.gmra.mrb[0].mxu0 %v115
    %v205 = vpop.f32.mrb[0].mxu0
    %v206 = vadd.f32 %v137, %v205
    %v207 = vpop.f32.mrb[0].mxu0
    %208 = vdwg.mxu0
    %209 = vst [vmem:[#allocation2] sm:$0xff] %v206
    // Predicated region
    $region22: #{latent_block.1} parent=1 // pred_check
      _
    $region23: #{latent_block.1} parent=1 // pred_check_branch
      %211 = sbr.rel (0) target = $region25
    $region24: #{latent_block.1} parent=1 // pred_region
      %s213 = ssub.s32 128, 128
      %214 = vsyncadd [#allocation3], %s213
      %s216 = sshll.u32 [#allocation2], 4
      %s217 = int_to_ptr.vmem [resolvable:$true] %s216
      %219 = dma.vmem_to_hbm [thread:$0]  %s217, 128, %s5, [#allocation3]
    $region25: #{latent_block.1} parent=1 // pred_fallthru
      _
    // Predicated region
    $region26: #{latent_block.1} parent=1 // pred_check
      _
    $region27: #{latent_block.1} parent=1 // pred_check_branch
      %221 = sbr.rel (0) target = $region29
    $region28: #{latent_block.1} parent=1 // pred_region
      %222 = dma.done [#allocation3], 128
    $region29: #{latent_block.1} parent=1 // pred_fallthru
      _
    %223 = vsyncpa [#allocation3], 1

</llo_original>
